<compile_context>
chip_gen: v5e
topology: v5e:2x2
jax: 0.10.0
libtpu: 0.0.40
codegen_flags: <defaults>
</compile_context>

<pallas_src>
import functools
import math

import jax
import jax.numpy as jnp
from jax import lax
from jax.experimental import pallas as pl
from jax.experimental.pallas import tpu as pltpu

BATCH = 2          # batch_size in the PyTorch module
DIM = 32           # embedding dimension (hidden)
TEMPERATURE = 0.5  # registered buffer 'temperature'

_INV_T = 1.0 / TEMPERATURE
_EXP_INV_T = math.exp(_INV_T)           # analytic diag term exp(<z,z>/t), unit rows
_CONTRACT_LAST = (((1,), (1,)), ((), ()))   # dot_general: contract last axis of both


def _l2_normalize(x):
    """F.normalize(x, dim=1) == x / max(||x||, 1e-12), via rsqrt. Returns (z, sumsq)."""
    sumsq = jnp.sum(x * x, axis=1, keepdims=True)
    z = x * lax.rsqrt(jnp.maximum(sumsq, 1e-24))   # sqrt(1e-24) == 1e-12
    return z, sumsq


# --------------------------------------------------------------------------
# Small / default-shape kernel (single shot, whole arrays in VMEM).
# --------------------------------------------------------------------------
def _contrastive_loss_small_kernel(xi_ref, xj_ref, loss_ref):
    B = xi_ref.shape[0]

    xi = xi_ref[...].astype(jnp.float32)
    xj = xj_ref[...].astype(jnp.float32)
    zi, sq_i = _l2_normalize(xi)
    zj, sq_j = _l2_normalize(xj)

    # 2x2 block structure of the (2B,2B) similarity matrix; no concat, no mask.
    # (At large D cast zi/zj to bf16 here for MXU throughput on v6e/v7x while
    # keeping preferred_element_type=f32; irrelevant at D=32.)
    e_ii = jnp.exp(_INV_T * lax.dot_general(
        zi, zi, _CONTRACT_LAST, preferred_element_type=jnp.float32))
    e_ij = jnp.exp(_INV_T * lax.dot_general(
        zi, zj, _CONTRACT_LAST, preferred_element_type=jnp.float32))
    e_ji = jnp.exp(_INV_T * lax.dot_general(
        zj, zi, _CONTRACT_LAST, preferred_element_type=jnp.float32))
    e_jj = jnp.exp(_INV_T * lax.dot_general(
        zj, zj, _CONTRACT_LAST, preferred_element_type=jnp.float32))

    # Analytic diagonal correction (reuses sumsq; no second reduce / exp).
    diag_i = jnp.where(sq_i > 0.0, _EXP_INV_T, 1.0)        # (B, 1)
    diag_j = jnp.where(sq_j > 0.0, _EXP_INV_T, 1.0)        # (B, 1)

    denom_i = (jnp.sum(e_ii, axis=1, keepdims=True)
               + jnp.sum(e_ij, axis=1, keepdims=True) - diag_i)
    denom_j = (jnp.sum(e_ji, axis=1, keepdims=True)
               + jnp.sum(e_jj, axis=1, keepdims=True) - diag_j)

    # Positives: sim[k, k+B] == sim[k+B, k] == <zi_k, zj_k>.
    pos = jnp.sum(zi * zj, axis=1, keepdims=True)           # (B, 1)

    # Log-space loss: -log(exp(p/t)/den) = log(den) - p/t, averaged over 2B rows.
    loss = (jnp.sum(jnp.log(denom_i)) + jnp.sum(jnp.log(denom_j))
            - 2.0 * _INV_T * jnp.sum(pos)) / (2.0 * B)
    loss_ref[0, 0] = loss


def contrastive_loss(emb_i, emb_j):
    """NT-Xent loss for small batches (everything fits in one VMEM shot)."""
    out = pl.pallas_call(
        _contrastive_loss_small_kernel,
        out_shape=jax.ShapeDtypeStruct((1, 1), jnp.float32),
        in_specs=[pl.BlockSpec(memory_space=pltpu.MemorySpace.VMEM),
                  pl.BlockSpec(memory_space=pltpu.MemorySpace.VMEM)],
        out_specs=pl.BlockSpec(memory_space=pltpu.MemorySpace.SMEM),
    )(emb_i, emb_j)
    return out[0, 0]


# --------------------------------------------------------------------------
# At-scale tiled kernel: never materialises the (2B,2B) similarity matrix.
# --------------------------------------------------------------------------
def _contrastive_loss_tiled_kernel(q_ref, k_ref, p_ref, out_ref, denom_sc, *,
                                   mxu_dtype):
    ki = pl.program_id(1)

    @pl.when(ki == 0)
    def _():
        denom_sc[...] = jnp.zeros_like(denom_sc)

    zq, sq_q = _l2_normalize(q_ref[...].astype(jnp.float32))
    zk, _ = _l2_normalize(k_ref[...].astype(jnp.float32))

    # MXU: (tq, D) x (tk, D)^T contracted on the last axis (no explicit
    # transpose).  mxu_dtype=bf16 at large D on v6e/v7x; f32 accumulation.
    sim = lax.dot_general(zq.astype(mxu_dtype), zk.astype(mxu_dtype),
                          _CONTRACT_LAST, preferred_element_type=jnp.float32)
    # |sim/t| <= 2/TEMPERATURE is bounded, so a plain running sum is safe
    # (no online max rescaling).  Keep exp + accumulation in f32 (v5e has no
    # bf16 VPU/EUP); switch the exp tile to bf16 on v6e/v7x if EUP-bound.
    denom_sc[...] += jnp.sum(jnp.exp(_INV_T * sim), axis=1, keepdims=True)

    @pl.when(ki == pl.num_programs(1) - 1)
    def _():
        # Positive pair of every query row lives in the block B rows away
        # (mod 2B) -- delivered by p_ref's index_map, resident across ki.
        zp, _ = _l2_normalize(p_ref[...].astype(jnp.float32))
        pos = jnp.sum(zq * zp, axis=1, keepdims=True)        # (tq, 1)
        diag = jnp.where(sq_q > 0.0, _EXP_INV_T, 1.0)        # analytic diagonal
        out_ref[...] = jnp.log(denom_sc[...] - diag) - _INV_T * pos


def contrastive_loss_tiled(emb_i, emb_j, *, tq=256, tk=512,
                           mxu_dtype=jnp.float32):
    """Flash-style tiled NT-Xent for large B.  Requires tq | B and tk | 2B."""
    B, D = emb_i.shape
    tq = min(tq, B)
    tk = min(tk, 2 * B)
    assert B % tq == 0 and (2 * B) % tk == 0 and tq % 8 == 0 and tk % 8 == 0

    # O(2B*D) concat is negligible next to the O((2B)^2 * D) kernel work here
    # (the concat is only worth removing in the small single-shot path).
    reps = jnp.concatenate([emb_i, emb_j], axis=0)           # (2B, D)
    n2 = 2 * B
    n_q, n_k = n2 // tq, n2 // tk
    half = B // tq                                           # block offset of the positive pair

    kernel = functools.partial(_contrastive_loss_tiled_kernel, mxu_dtype=mxu_dtype)
    per_row = pl.pallas_call(
        kernel,
        out_shape=jax.ShapeDtypeStruct((n2, 1), jnp.float32),
        grid=(n_q, n_k),
        in_specs=[
            pl.BlockSpec((tq, D), lambda qi, ki: (qi, 0)),                   # query tile
            pl.BlockSpec((tk, D), lambda qi, ki: (ki, 0)),                   # key tile
            pl.BlockSpec((tq, D), lambda qi, ki: ((qi + half) % n_q, 0)),    # positive-pair tile
        ],
        out_specs=pl.BlockSpec((tq, 1), lambda qi, ki: (qi, 0)),
        scratch_shapes=[pltpu.VMEM((tq, 1), jnp.float32)],
        compiler_params=pltpu.CompilerParams(
            dimension_semantics=("parallel", "arbitrary")),
    )(reps, reps, reps)
    return jnp.sum(per_row) / n2


# --------------------------------------------------------------------------
# Pure-JAX reference matching the PyTorch forward exactly.
# --------------------------------------------------------------------------
def contrastive_loss_ref(emb_i, emb_j):
    def norm(x):
        return x / jnp.maximum(jnp.linalg.norm(x, axis=1, keepdims=True), 1e-12)
    z = jnp.concatenate([norm(emb_i), norm(emb_j)], axis=0)
    n = jnp.linalg.norm(z, axis=1, keepdims=True)
    sim = (z @ z.T) / jnp.maximum(n * n.T, 1e-8)
    B = emb_i.shape[0]
    sim_ij = jnp.diagonal(sim, offset=B)
    sim_ji = jnp.diagonal(sim, offset=-B)
    positives = jnp.concatenate([sim_ij, sim_ji], axis=0)
    neg_mask = 1.0 - jnp.eye(2 * B, dtype=jnp.float32)
    nominator = jnp.exp(positives / TEMPERATURE)
    denominator = jnp.sum(neg_mask * jnp.exp(sim / TEMPERATURE), axis=1)
    return jnp.sum(-jnp.log(nominator / denominator)) / (2 * B)


if __name__ == "__main__":
    key = jax.random.PRNGKey(0)
    k_i, k_j = jax.random.split(key)

    # Primary: the module's default shape (batch_size=2, hidden=32).
    emb_i = jax.random.normal(k_i, (BATCH, DIM), dtype=jnp.float32)
    emb_j = jax.random.normal(k_j, (BATCH, DIM), dtype=jnp.float32)
    loss = jax.jit(contrastive_loss)(emb_i, emb_j)
    jax.block_until_ready(loss)
    ref = contrastive_loss_ref(emb_i, emb_j)
    assert jnp.allclose(loss, ref, atol=1e-5, rtol=1e-5), (loss, ref)

    # Secondary: exercise the tiled at-scale path on a modest shape (grid 2x2).
    kb_i, kb_j = jax.random.split(jax.random.PRNGKey(1))
    big_i = jax.random.normal(kb_i, (64, DIM), dtype=jnp.float32)
    big_j = jax.random.normal(kb_j, (64, DIM), dtype=jnp.float32)
    loss_t = jax.jit(functools.partial(contrastive_loss_tiled, tq=64, tk=64))(big_i, big_j)
    jax.block_until_ready(loss_t)
    ref_t = contrastive_loss_ref(big_i, big_j)
    assert jnp.allclose(loss_t, ref_t, atol=1e-4, rtol=1e-4), (loss_t, ref_t)

    print("KERNEL_OK")
</pallas_src>

<mosaic_0001>
module attributes {stable_mosaic.version = 11 : i64} {
  func.func @_contrastive_loss_small_kernel(%arg0: memref<2x32xf32, #tpu.memory_space<vmem>>, %arg1: memref<2x32xf32, #tpu.memory_space<vmem>>, %arg2: memref<1x1xf32, #tpu.memory_space<smem>>) attributes {dimension_semantics = [], scalar_prefetch = 0 : i64, scratch_operands = 0 : i64, tpu.core_type = #tpu.core_type<tc>} {
    %c0 = arith.constant 0 : index
    %c0_0 = arith.constant 0 : index
    %0 = vector.load %arg0[%c0, %c0_0] : memref<2x32xf32, #tpu.memory_space<vmem>>, vector<2x32xf32>
    %c0_1 = arith.constant 0 : index
    %c0_2 = arith.constant 0 : index
    %1 = vector.load %arg1[%c0_1, %c0_2] : memref<2x32xf32, #tpu.memory_space<vmem>>, vector<2x32xf32>
    %2 = arith.mulf %0, %0 : vector<2x32xf32>
    %cst = arith.constant dense<0.000000e+00> : vector<2xf32>
    %3 = vector.multi_reduction <add>, %2, %cst [1] : vector<2x32xf32> to vector<2xf32>
    %4 = vector.shape_cast %3 : vector<2xf32> to vector<2x1xf32>
    %cst_3 = arith.constant 1.000000e-24 : f32
    %5 = vector.broadcast %cst_3 : f32 to vector<2x1xf32>
    %6 = arith.maximumf %4, %5 : vector<2x1xf32>
    %7 = math.rsqrt %6 : vector<2x1xf32>
    %8 = vector.broadcast %7 : vector<2x1xf32> to vector<2x32xf32>
    %9 = arith.mulf %0, %8 : vector<2x32xf32>
    %10 = arith.mulf %1, %1 : vector<2x32xf32>
    %cst_4 = arith.constant dense<0.000000e+00> : vector<2xf32>
    %11 = vector.multi_reduction <add>, %10, %cst_4 [1] : vector<2x32xf32> to vector<2xf32>
    %12 = vector.shape_cast %11 : vector<2xf32> to vector<2x1xf32>
    %cst_5 = arith.constant 1.000000e-24 : f32
    %13 = vector.broadcast %cst_5 : f32 to vector<2x1xf32>
    %14 = arith.maximumf %12, %13 : vector<2x1xf32>
    %15 = math.rsqrt %14 : vector<2x1xf32>
    %16 = vector.broadcast %15 : vector<2x1xf32> to vector<2x32xf32>
    %17 = arith.mulf %1, %16 : vector<2x32xf32>
    %cst_6 = arith.constant dense<0.000000e+00> : vector<2x2xf32>
    %18 = tpu.matmul %9, %9, %cst_6 {dimension_numbers = #tpu.dot_dimension_numbers<[1], [1], [0], [0], [0, 0, 1, 0], [], []>} : vector<2x32xf32>, vector<2x32xf32>, vector<2x2xf32> -> vector<2x2xf32>
    %cst_7 = arith.constant 2.000000e+00 : f32
    %19 = vector.broadcast %cst_7 : f32 to vector<2x2xf32>
    %20 = arith.mulf %19, %18 : vector<2x2xf32>
    %21 = math.exp %20 : vector<2x2xf32>
    %cst_8 = arith.constant dense<0.000000e+00> : vector<2x2xf32>
    %22 = tpu.matmul %9, %17, %cst_8 {dimension_numbers = #tpu.dot_dimension_numbers<[1], [1], [0], [0], [0, 0, 1, 0], [], []>} : vector<2x32xf32>, vector<2x32xf32>, vector<2x2xf32> -> vector<2x2xf32>
    %cst_9 = arith.constant 2.000000e+00 : f32
    %23 = vector.broadcast %cst_9 : f32 to vector<2x2xf32>
    %24 = arith.mulf %23, %22 : vector<2x2xf32>
    %25 = math.exp %24 : vector<2x2xf32>
    %cst_10 = arith.constant dense<0.000000e+00> : vector<2x2xf32>
    %26 = tpu.matmul %17, %9, %cst_10 {dimension_numbers = #tpu.dot_dimension_numbers<[1], [1], [0], [0], [0, 0, 1, 0], [], []>} : vector<2x32xf32>, vector<2x32xf32>, vector<2x2xf32> -> vector<2x2xf32>
    %cst_11 = arith.constant 2.000000e+00 : f32
    %27 = vector.broadcast %cst_11 : f32 to vector<2x2xf32>
    %28 = arith.mulf %27, %26 : vector<2x2xf32>
    %29 = math.exp %28 : vector<2x2xf32>
    %cst_12 = arith.constant dense<0.000000e+00> : vector<2x2xf32>
    %30 = tpu.matmul %17, %17, %cst_12 {dimension_numbers = #tpu.dot_dimension_numbers<[1], [1], [0], [0], [0, 0, 1, 0], [], []>} : vector<2x32xf32>, vector<2x32xf32>, vector<2x2xf32> -> vector<2x2xf32>
    %cst_13 = arith.constant 2.000000e+00 : f32
    %31 = vector.broadcast %cst_13 : f32 to vector<2x2xf32>
    %32 = arith.mulf %31, %30 : vector<2x2xf32>
    %33 = math.exp %32 : vector<2x2xf32>
    %cst_14 = arith.constant 0.000000e+00 : f32
    %34 = vector.broadcast %cst_14 : f32 to vector<2x1xf32>
    %35 = arith.cmpf ogt, %4, %34 : vector<2x1xf32>
    %cst_15 = arith.constant 7.3890562 : f32
    %cst_16 = arith.constant 1.000000e+00 : f32
    %36 = vector.broadcast %cst_15 : f32 to vector<2x1xf32>
    %37 = vector.broadcast %cst_16 : f32 to vector<2x1xf32>
    %38 = arith.select %35, %36, %37 : vector<2x1xi1>, vector<2x1xf32>
    %cst_17 = arith.constant 0.000000e+00 : f32
    %39 = vector.broadcast %cst_17 : f32 to vector<2x1xf32>
    %40 = arith.cmpf ogt, %12, %39 : vector<2x1xf32>
    %cst_18 = arith.constant 7.3890562 : f32
    %cst_19 = arith.constant 1.000000e+00 : f32
    %41 = vector.broadcast %cst_18 : f32 to vector<2x1xf32>
    %42 = vector.broadcast %cst_19 : f32 to vector<2x1xf32>
    %43 = arith.select %40, %41, %42 : vector<2x1xi1>, vector<2x1xf32>
    %cst_20 = arith.constant dense<0.000000e+00> : vector<2xf32>
    %44 = vector.multi_reduction <add>, %21, %cst_20 [1] : vector<2x2xf32> to vector<2xf32>
    %45 = vector.shape_cast %44 : vector<2xf32> to vector<2x1xf32>
    %cst_21 = arith.constant dense<0.000000e+00> : vector<2xf32>
    %46 = vector.multi_reduction <add>, %25, %cst_21 [1] : vector<2x2xf32> to vector<2xf32>
    %47 = vector.shape_cast %46 : vector<2xf32> to vector<2x1xf32>
    %48 = arith.addf %45, %47 : vector<2x1xf32>
    %49 = arith.subf %48, %38 : vector<2x1xf32>
    %cst_22 = arith.constant dense<0.000000e+00> : vector<2xf32>
    %50 = vector.multi_reduction <add>, %29, %cst_22 [1] : vector<2x2xf32> to vector<2xf32>
    %51 = vector.shape_cast %50 : vector<2xf32> to vector<2x1xf32>
    %cst_23 = arith.constant dense<0.000000e+00> : vector<2xf32>
    %52 = vector.multi_reduction <add>, %33, %cst_23 [1] : vector<2x2xf32> to vector<2xf32>
    %53 = vector.shape_cast %52 : vector<2xf32> to vector<2x1xf32>
    %54 = arith.addf %51, %53 : vector<2x1xf32>
    %55 = arith.subf %54, %43 : vector<2x1xf32>
    %56 = arith.mulf %9, %17 : vector<2x32xf32>
    %cst_24 = arith.constant dense<0.000000e+00> : vector<2xf32>
    %57 = vector.multi_reduction <add>, %56, %cst_24 [1] : vector<2x32xf32> to vector<2xf32>
    %58 = vector.shape_cast %57 : vector<2xf32> to vector<2x1xf32>
    %59 = math.log %49 : vector<2x1xf32>
    %60 = vector.shape_cast %59 : vector<2x1xf32> to vector<1x2x1xf32>
    %cst_25 = arith.constant dense<0.000000e+00> : vector<1xf32>
    %61 = vector.multi_reduction <add>, %60, %cst_25 [1, 2] : vector<1x2x1xf32> to vector<1xf32>
    %62 = vector.shape_cast %61 : vector<1xf32> to vector<1x1x1xf32>
    %63 = vector.extract %62[0, 0, 0] : f32 from vector<1x1x1xf32>
    %64 = math.log %55 : vector<2x1xf32>
    %65 = vector.shape_cast %64 : vector<2x1xf32> to vector<1x2x1xf32>
    %cst_26 = arith.constant dense<0.000000e+00> : vector<1xf32>
    %66 = vector.multi_reduction <add>, %65, %cst_26 [1, 2] : vector<1x2x1xf32> to vector<1xf32>
    %67 = vector.shape_cast %66 : vector<1xf32> to vector<1x1x1xf32>
    %68 = vector.extract %67[0, 0, 0] : f32 from vector<1x1x1xf32>
    %69 = arith.addf %63, %68 : f32
    %70 = vector.shape_cast %58 : vector<2x1xf32> to vector<1x2x1xf32>
    %cst_27 = arith.constant dense<0.000000e+00> : vector<1xf32>
    %71 = vector.multi_reduction <add>, %70, %cst_27 [1, 2] : vector<1x2x1xf32> to vector<1xf32>
    %72 = vector.shape_cast %71 : vector<1xf32> to vector<1x1x1xf32>
    %73 = vector.extract %72[0, 0, 0] : f32 from vector<1x1x1xf32>
    %cst_28 = arith.constant 4.000000e+00 : f32
    %74 = arith.mulf %cst_28, %73 : f32
    %75 = arith.subf %69, %74 : f32
    %cst_29 = arith.constant 4.000000e+00 : f32
    %76 = arith.divf %75, %cst_29 : f32
    %c0_30 = arith.constant 0 : index
    %c0_31 = arith.constant 0 : index
    %77 = memref.load %arg2[%c0_30, %c0_31] : memref<1x1xf32, #tpu.memory_space<smem>>
    memref.store %76, %arg2[%c0_30, %c0_31] : memref<1x1xf32, #tpu.memory_space<smem>>
    return
  }
}

</mosaic_0001>

<llo_original>
// kernel: contrastive_loss.1
$region0: #{contrastive_loss.1}
  #allocation0 [shape = 'u32[]', space=smem, size = 0x4, offset = 0x4, fixed_abs, tag = 'smem constant byte address 0x4 - core index']
  #allocation1 [shape = 'u32[72,128]{1,0:T(1,128)}', space=vmem, size = 0x9000, scoped, tag = 'internal scratch']
  %s0 = inlined_call_operand.hbm [shape: f32[2,32], index: 0, kind: input, shape index: {}]
  %s1 = inlined_call_operand.hbm [shape: f32[2,32], index: 1, kind: input, shape index: {}]
  %s2 = inlined_call_operand.hbm [shape: f32[1,1], index: 2, kind: output, shape index: {}]
  %s3 = sld [smem:[#allocation0]]
  $region26: #{contrastive_loss.1} parent=0
    _
  %s5 = ssub.s32 1, %s3
  %s6 = scalar_select 0, %s5, %s3
  $region1: #{contrastive_loss.1} parent=0
    #allocation2 [shape = 'u8[1024]{0}', space=vmem, size = 0x400, scoped, tag = 'input window, operand 0, single buffered']
    #allocation3 [shape = 's32[1]{0}', space=sflag, size = 0x4, scoped, tag = 'scoped memory for contrastive_loss.1']
    #allocation4 [shape = 's32[1]{0}', space=sflag, size = 0x4, scoped, tag = 'scoped memory for contrastive_loss.1']
    #allocation5 [shape = 'u8[1024]{0}', space=vmem, size = 0x400, scoped, tag = 'input window, operand 1, single buffered']
    #allocation6 [shape = 's32[1]{0}', space=sflag, size = 0x4, scoped, tag = 'scoped memory for contrastive_loss.1']
    #allocation7 [shape = 'u8[512]{0}', space=smem, size = 0x200, scoped, tag = 'output window, operand 0, single buffered']
    %7 = vsyncpa [#allocation3], 0
    %8 = vsyncpa [#allocation6], 0
    %9 = vsyncpa [#allocation4], 0
    // Predicated region
    $region2: #{contrastive_loss.1} parent=1 // pred_check
      _
    $region3: #{contrastive_loss.1} parent=1 // pred_check_branch
      %11 = sbr.rel (0) target = $region5
    $region4: #{contrastive_loss.1} parent=1 // pred_region
      %13 = vsyncadd [#allocation3], 0
      %s15 = sshll.u32 %s0, 4
      %s16 = int_to_ptr.hbm [resolvable:$true] %s15
      %s17 = sshll.u32 [#allocation2], 4
      %s18 = int_to_ptr.vmem [resolvable:$true] %s17
      %20 = dma.hbm_to_vmem [thread:$0]  %s16, 32, %s18, [#allocation3]
    $region5: #{contrastive_loss.1} parent=1 // pred_fallthru
      _
    // Predicated region
    $region6: #{contrastive_loss.1} parent=1 // pred_check
      _
    $region7: #{contrastive_loss.1} parent=1 // pred_check_branch
      %22 = sbr.rel (0) target = $region9
    $region8: #{contrastive_loss.1} parent=1 // pred_region
      %24 = vsyncadd [#allocation6], 0
      %s26 = sshll.u32 %s1, 4
      %s27 = int_to_ptr.hbm [resolvable:$true] %s26
      %s28 = sshll.u32 [#allocation5], 4
      %s29 = int_to_ptr.vmem [resolvable:$true] %s28
      %31 = dma.hbm_to_vmem [thread:$0]  %s27, 32, %s29, [#allocation6]
    $region9: #{contrastive_loss.1} parent=1 // pred_fallthru
      _
    // Predicated region
    $region10: #{contrastive_loss.1} parent=1 // pred_check
      _
    $region11: #{contrastive_loss.1} parent=1 // pred_check_branch
      %33 = sbr.rel (0) target = $region13
    $region12: #{contrastive_loss.1} parent=1 // pred_region
      %35 = dma.done [#allocation3], 32
    $region13: #{contrastive_loss.1} parent=1 // pred_fallthru
      _
    // Predicated region
    $region14: #{contrastive_loss.1} parent=1 // pred_check
      _
    $region15: #{contrastive_loss.1} parent=1 // pred_check_branch
      %37 = sbr.rel (0) target = $region17
    $region16: #{contrastive_loss.1} parent=1 // pred_region
      %39 = dma.done [#allocation6], 32
    $region17: #{contrastive_loss.1} parent=1 // pred_fallthru
      _
    %v40 = vld [vmem:[#allocation2] sm:$0x3]
    %v41 = vld [vmem:[#allocation5] sm:$0x3]
    %v42 = vmul.f32 %v40, %v40
    %vm43 = vcmask 254976
    %v44 = vsel %vm43, %v42, 0.0
    %45 = vadd.xlane.f32.xlu0 %v44
    %v46 = vpop.xlane.xlu0 %45
    %v47 = vmax.f32 %v46, 1e-24
    %v48 = vrsqrt.pop %v47
    %v49 = vmul.f32 %v48, %v47
    %v50 = vmul.f32 %v49, %v48
    %v51 = vmul.f32 0.5, %v50
    %v52 = vsub.f32 1.5, %v51
    %v53 = vmul.f32 %v48, %v52
    %vm54 = vweird.f32 %v47
    %vm55 = vweird.f32 %v48
    %vm56 = vmor %vm54, %vm55
    %v57 = vsel %vm56, %v48, %v53
    %v58 = vmul.f32 %v40, %v57
    %v59 = vmul.f32 %v41, %v41
    %v60 = vsel %vm43, %v59, 0.0
    %61 = vadd.xlane.f32.xlu0 %v60
    %v62 = vpop.xlane.xlu0 %61
    %v63 = vmax.f32 %v62, 1e-24
    %v64 = vrsqrt.pop %v63
    %v65 = vmul.f32 %v64, %v63
    %v66 = vmul.f32 %v65, %v64
    %v67 = vmul.f32 0.5, %v66
    %v68 = vsub.f32 1.5, %v67
    %v69 = vmul.f32 %v64, %v68
    %vm70 = vweird.f32 %v63
    %vm71 = vweird.f32 %v64
    %vm72 = vmor %vm70, %vm71
    %v73 = vsel %vm72, %v64, %v69
    %v74 = vmul.f32 %v41, %v73
    %vm75 = vcmask 261120
    %v77 = vsel %vm75, %v58, 0
    %79 = vmatpush.xpose.msra.mxu0 0.0
    %80 = vmatpush.xpose.msra.mxu0 0.0
    %81 = vmatpush.xpose.msra.mxu0 0.0
    %82 = vmatpush.xpose.msra.mxu0 0.0
    %83 = vmatpush.xpose.msra.mxu0 0.0
    %84 = vmatpush.xpose.msra.mxu0 0.0
    %85 = vmatpush.xpose.msra.mxu0 0.0
    %86 = vmatpush.xpose.msra.mxu0 0.0
    %87 = vmatpush.xpose.msra.mxu0 0.0
    %88 = vmatpush.xpose.msra.mxu0 0.0
    %89 = vmatpush.xpose.msra.mxu0 0.0
    %90 = vmatpush.xpose.msra.mxu0 0.0
    %91 = vmatpush.xpose.msra.mxu0 0.0
    %92 = vmatpush.xpose.msra.mxu0 0.0
    %93 = vmatpush.xpose.msra.mxu0 0.0
    %94 = vmatpush.xpose.msra.mxu0 %v77
    %95 = vmatmul.f32.gmra.mxu0 %v77
    %v96 = vpop.f32.mrf.mxu0
    %v97 = vadd.f32 0.0, %v96
    %98 = vdwg.mxu0
    %v99 = vmul.f32 %v97, 2.0
    %v100 = vmul.f32 %v99, 1.442695
    %v101 = vpow.pop %v100
    %v103 = vsel %vm75, %v74, 0
    %105 = vmatpush.xpose.msra.mxu0 0.0
    %106 = vmatpush.xpose.msra.mxu0 0.0
    %107 = vmatpush.xpose.msra.mxu0 0.0
    %108 = vmatpush.xpose.msra.mxu0 0.0
    %109 = vmatpush.xpose.msra.mxu0 0.0
    %110 = vmatpush.xpose.msra.mxu0 0.0
    %111 = vmatpush.xpose.msra.mxu0 0.0
    %112 = vmatpush.xpose.msra.mxu0 0.0
    %113 = vmatpush.xpose.msra.mxu0 0.0
    %114 = vmatpush.xpose.msra.mxu0 0.0
    %115 = vmatpush.xpose.msra.mxu0 0.0
    %116 = vmatpush.xpose.msra.mxu0 0.0
    %117 = vmatpush.xpose.msra.mxu0 0.0
    %118 = vmatpush.xpose.msra.mxu0 0.0
    %119 = vmatpush.xpose.msra.mxu0 0.0
    %120 = vmatpush.xpose.msra.mxu0 %v103
    %121 = vmatmul.f32.gmra.mxu0 %v77
    %v122 = vpop.f32.mrf.mxu0
    %v123 = vadd.f32 0.0, %v122
    %124 = vdwg.mxu0
    %v125 = vmul.f32 %v123, 2.0
    %v126 = vmul.f32 %v125, 1.442695
    %v127 = vpow.pop %v126
    %128 = vmatpush.xpose.msra.mxu0 0.0
    %129 = vmatpush.xpose.msra.mxu0 0.0
    %130 = vmatpush.xpose.msra.mxu0 0.0
    %131 = vmatpush.xpose.msra.mxu0 0.0
    %132 = vmatpush.xpose.msra.mxu0 0.0
    %133 = vmatpush.xpose.msra.mxu0 0.0
    %134 = vmatpush.xpose.msra.mxu0 0.0
    %135 = vmatpush.xpose.msra.mxu0 0.0
    %136 = vmatpush.xpose.msra.mxu0 0.0
    %137 = vmatpush.xpose.msra.mxu0 0.0
    %138 = vmatpush.xpose.msra.mxu0 0.0
    %139 = vmatpush.xpose.msra.mxu0 0.0
    %140 = vmatpush.xpose.msra.mxu0 0.0
    %141 = vmatpush.xpose.msra.mxu0 0.0
    %142 = vmatpush.xpose.msra.mxu0 0.0
    %143 = vmatpush.xpose.msra.mxu0 %v77
    %144 = vmatmul.f32.gmra.mxu0 %v103
    %v145 = vpop.f32.mrf.mxu0
    %v146 = vadd.f32 0.0, %v145
    %147 = vdwg.mxu0
    %v148 = vmul.f32 %v146, 2.0
    %v149 = vmul.f32 %v148, 1.442695
    %v150 = vpow.pop %v149
    %151 = vmatpush.xpose.msra.mxu0 0.0
    %152 = vmatpush.xpose.msra.mxu0 0.0
    %153 = vmatpush.xpose.msra.mxu0 0.0
    %154 = vmatpush.xpose.msra.mxu0 0.0
    %155 = vmatpush.xpose.msra.mxu0 0.0
    %156 = vmatpush.xpose.msra.mxu0 0.0
    %157 = vmatpush.xpose.msra.mxu0 0.0
    %158 = vmatpush.xpose.msra.mxu0 0.0
    %159 = vmatpush.xpose.msra.mxu0 0.0
    %160 = vmatpush.xpose.msra.mxu0 0.0
    %161 = vmatpush.xpose.msra.mxu0 0.0
    %162 = vmatpush.xpose.msra.mxu0 0.0
    %163 = vmatpush.xpose.msra.mxu0 0.0
    %164 = vmatpush.xpose.msra.mxu0 0.0
    %165 = vmatpush.xpose.msra.mxu0 0.0
    %166 = vmatpush.xpose.msra.mxu0 %v103
    %167 = vmatmul.f32.gmra.mxu0 %v103
    %v168 = vpop.f32.mrf.mxu0
    %v169 = vadd.f32 0.0, %v168
    %170 = vdwg.mxu0
    %v171 = vmul.f32 %v169, 2.0
    %v172 = vmul.f32 %v171, 1.442695
    %v173 = vpow.pop %v172
    %vm174 = vcmp.gt.f32.partialorder %v46, 0.0
    %v175 = vsel %vm174, 7.389056, 1.0
    %vm176 = vcmp.gt.f32.partialorder %v62, 0.0
    %v177 = vsel %vm176, 7.389056, 1.0
    %vm178 = vcmask 9216
    %v179 = vsel %vm178, %v101, 0.0
    %180 = vadd.xlane.f32.xlu0 %v179
    %v181 = vpop.xlane.xlu0 %180
    %v182 = vsel %vm178, %v127, 0.0
    %183 = vadd.xlane.f32.xlu0 %v182
    %v184 = vpop.xlane.xlu0 %183
    %v185 = vadd.f32 %v181, %v184
    %v186 = vsub.f32 %v185, %v175
    %v187 = vsel %vm178, %v150, 0.0
    %188 = vadd.xlane.f32.xlu0 %v187
    %v189 = vpop.xlane.xlu0 %188
    %v190 = vsel %vm178, %v173, 0.0
    %191 = vadd.xlane.f32.xlu0 %v190
    %v192 = vpop.xlane.xlu0 %191
    %v193 = vadd.f32 %v189, %v192
    %v194 = vsub.f32 %v193, %v177
    %v195 = vmul.f32 %v58, %v74
    %v196 = vsel %vm43, %v195, 0.0
    %197 = vadd.xlane.f32.xlu0 %v196
    %v198 = vpop.xlane.xlu0 %197
    %v199 = vlog2.pop %v186
    %v200 = vmul.f32 %v199, 0.6931472
    %vm201 = vcmask 1024
    %v202 = vsel %vm201, %v200, 0.0
    %203 = vadd.xlane.f32.xlu0 %v202
    %v204 = vpop.xlane.xlu0 %203
    %v205 = vrot.slane %v204, 4
    %v206 = vadd.f32 %v204, %v205
    %v207 = vrot.slane %v206, 2
    %v208 = vadd.f32 %v206, %v207
    %v209 = vrot.slane %v208, 1
    %v210 = vadd.f32 %v208, %v209
    %s211 = vtos %v210
    %v212 = vlog2.pop %v194
    %v213 = vmul.f32 %v212, 0.6931472
    %v214 = vsel %vm201, %v213, 0.0
    %215 = vadd.xlane.f32.xlu0 %v214
    %v216 = vpop.xlane.xlu0 %215
    %v217 = vrot.slane %v216, 4
    %v218 = vadd.f32 %v216, %v217
    %v219 = vrot.slane %v218, 2
    %v220 = vadd.f32 %v218, %v219
    %v221 = vrot.slane %v220, 1
    %v222 = vadd.f32 %v220, %v221
    %s223 = vtos %v222
    %s224 = sadd.f32 %s211, %s223
    %v225 = vsel %vm201, %v198, 0.0
    %226 = vadd.xlane.f32.xlu0 %v225
    %v227 = vpop.xlane.xlu0 %226
    %v228 = vrot.slane %v227, 4
    %v229 = vadd.f32 %v227, %v228
    %v230 = vrot.slane %v229, 2
    %v231 = vadd.f32 %v229, %v230
    %v232 = vrot.slane %v231, 1
    %v233 = vadd.f32 %v231, %v232
    %s234 = vtos %v233
    %s235 = smul.f32 %s234, 4.0
    %s236 = ssub.f32 %s224, %s235
    %v237 = vrcp.pop 4.0
    %v238 = vmul.f32 4.0, %v237
    %v239 = vsub.f32 1.0, %v238
    %v240 = vmul.f32 %v237, %v239
    %v241 = vadd.f32 %v237, %v240
    %vm242 = vweird.f32 %v237
    %v243 = vsel %vm242, %v237, %v241
    %s244 = vtos %v243
    %s245 = smul.f32 %s236, %s244
    %s246 = scalar_lea.smem [#allocation7], 0
    %247 = sst [smem:[%s246]] %s245
    // Predicated region
    $region18: #{contrastive_loss.1} parent=1 // pred_check
      _
    $region19: #{contrastive_loss.1} parent=1 // pred_check_branch
      %249 = sbr.rel (0) target = $region21
    $region20: #{contrastive_loss.1} parent=1 // pred_region
      %251 = vsyncadd [#allocation4], 0
      %s253 = sshll.u32 %s2, 4
      %s254 = int_to_ptr.hbm [resolvable:$true] %s253
      %256 = dma.smem_to_hbm [#allocation7], 16, %s254, [#allocation4]
    $region21: #{contrastive_loss.1} parent=1 // pred_fallthru
      _
    // Predicated region
    $region22: #{contrastive_loss.1} parent=1 // pred_check
      _
    $region23: #{contrastive_loss.1} parent=1 // pred_check_branch
      %258 = sbr.rel (0) target = $region25
    $region24: #{contrastive_loss.1} parent=1 // pred_region
      %260 = dma.done [#allocation4], 16
    $region25: #{contrastive_loss.1} parent=1 // pred_fallthru
      _
    %261 = sfence
    %262 = vsyncpa [#allocation3], 1
    %263 = vsyncpa [#allocation6], 1
    %264 = vsyncpa [#allocation4], 1

</llo_original>
